<compile_context>
chip_gen: v6e
topology: v6e:2x2x1
jax: 0.10.0
libtpu: 0.0.40
codegen_flags: <defaults>
</compile_context>

<pallas_src>
import math
from functools import partial

import jax
import jax.numpy as jnp
from jax import lax
from jax.experimental import pallas as pl
from jax.experimental.pallas import tpu as pltpu

HIDDEN = 128      # fc1 width (fixed by the module)
HEAD = 64         # actor_fc / critic_fc width (fixed by the module)
OUT_LANES = 128   # lane-dense fused output width


def _round_up(n, m):
    return ((n + m - 1) // m) * m


def _actor_critic_kernel(x_ref, slab_ref, o_ref, *, in_pad, action_dim,
                         use_bf16_matmul):
    # Static row offsets into the packed parameter slab (all 8-row aligned).
    r0 = 0                       # W1 (+ fc1 bias row), padded to `in_pad` rows
    r1 = r0 + in_pad             # fused actor|critic hidden weights  [128,128]
    r2 = r1 + HIDDEN             # fused hidden bias (row 0 of 8-row segment)
    r3 = r2 + 8                  # block-diagonal output weights      [128,128]
    r4 = r3 + HIDDEN             # fused output bias (row 0 of 8-row segment)

    x = x_ref[...]                                   # [TB, in_pad] (ones col folded)
    w1 = slab_ref[r0:r0 + in_pad, :]                 # [in_pad, 128]
    whc = slab_ref[r1:r1 + HIDDEN, :]                # [128, 128]
    bhc = slab_ref[r2:r2 + 1, :]                     # [1, 128]
    wout = slab_ref[r3:r3 + HIDDEN, :]               # [128, 128]
    bout = slab_ref[r4:r4 + 1, :]                    # [1, 128]

    # Shared trunk: relu(x_aug @ W1_aug)   (fc1 bias folded via ones column)
    h = jnp.maximum(jnp.dot(x, w1, preferred_element_type=jnp.float32), 0.0)

    # Fused actor/critic hidden layers: lanes 0:64 = actor, 64:128 = critic.
    # Optional bf16 MXU inputs (f32 accumulation); elementwise stays f32 for v5e.
    if use_bf16_matmul:
        h_mm, whc_mm = h.astype(jnp.bfloat16), whc.astype(jnp.bfloat16)
    else:
        h_mm, whc_mm = h, whc
    hc = jnp.maximum(
        jnp.dot(h_mm, whc_mm, preferred_element_type=jnp.float32) + bhc, 0.0)

    # Fused (block-diagonal) output layer:
    #   lanes 0:action_dim = actor logits, lane action_dim = value, rest = 0
    if use_bf16_matmul:
        hc_mm, wout_mm = hc.astype(jnp.bfloat16), wout.astype(jnp.bfloat16)
    else:
        hc_mm, wout_mm = hc, wout
    out = jnp.dot(hc_mm, wout_mm, preferred_element_type=jnp.float32) + bout

    # Masked, max-stabilized softmax over the actor lanes only.
    # Mask built once as a [1, OUT_LANES] row; broadcasting covers the batch dim.
    lane = lax.broadcasted_iota(jnp.int32, (1, OUT_LANES), 1)
    amask = lane < action_dim
    masked = jnp.where(amask, out, -jnp.inf)
    m = jnp.max(masked, axis=-1, keepdims=True)
    e = jnp.exp(masked - m)                          # exactly 0 on masked lanes
    denom = jnp.sum(e, axis=-1, keepdims=True)
    probs = e * pl.reciprocal(denom)                 # exact recip (keeps 1e-5 tol)

    # Single lane-dense store: probs | value | zeros
    o_ref[...] = jnp.where(amask, probs, out).astype(o_ref.dtype)


def pack_params(p, state_dim, action_dim):
    """Pack all five Linear layers into one [IN_PAD + 272, 128] f32 slab."""
    assert action_dim + 1 <= OUT_LANES
    in_pad = _round_up(state_dim + 1, 8)

    # Segment 0: fc1 weight with bias folded as an extra row, zero-padded to in_pad rows.
    w1_aug = jnp.concatenate([p["w1"], p["b1"]], axis=0)            # [sd+1, 128]
    w1_aug = jnp.pad(w1_aug, ((0, in_pad - (state_dim + 1)), (0, 0)))
    # Segment 1: fused actor|critic hidden weights.
    whc = jnp.concatenate([p["wa"], p["wc"]], axis=1)               # [128, 128]
    # Segment 2: fused hidden bias (row 0 valid), padded to 8 rows.
    bhc = jnp.pad(jnp.concatenate([p["ba"], p["bc"]], axis=1), ((0, 7), (0, 0)))
    # Segment 3: block-diagonal output weights, lane-padded to 128.
    wout = jnp.zeros((HIDDEN, OUT_LANES), jnp.float32)
    wout = wout.at[0:HEAD, 0:action_dim].set(p["wao"])
    wout = wout.at[HEAD:HIDDEN, action_dim:action_dim + 1].set(p["wco"])
    # Segment 4: fused output bias (row 0 valid), padded to 8 rows.
    bout = jnp.zeros((1, OUT_LANES), jnp.float32)
    bout = bout.at[:, 0:action_dim].set(p["bao"])
    bout = bout.at[:, action_dim:action_dim + 1].set(p["bco"])
    bout = jnp.pad(bout, ((0, 7), (0, 0)))

    slab = jnp.concatenate([w1_aug, whc, bhc, wout, bout], axis=0)  # [in_pad+272,128]
    return slab, in_pad


def _select_batch_tiling(B, max_batch_tile, min_grid_steps):
    """Pick (batch_tile, padded_batch) so padding waste is a handful of rows and,
    for non-tiny batches, the grid has >= min_grid_steps steps (v7x: 2 TCs)."""
    max_batch_tile = max(8, int(max_batch_tile))
    b8 = _round_up(B, 8)
    nsteps = max(pl.cdiv(b8, max_batch_tile), 1)
    if b8 >= min_grid_steps * 128:          # only force multi-step for decent batches
        nsteps = max(nsteps, min_grid_steps)
    tb = _round_up(pl.cdiv(b8, nsteps), 8)  # padding <= ~7 rows per grid step
    return tb, tb * nsteps


def actor_critic_forward(x, slab, *, state_dim, action_dim, in_pad,
                         max_batch_tile=1024, min_grid_steps=2,
                         out_dtype=jnp.float32, use_bf16_matmul=False,
                         return_fused=False):
    """x: [B, state_dim] f32; slab: packed parameter slab from pack_params.

    max_batch_tile: caller-tunable (1024 default; up to ~2048 stays well inside the
    scoped-VMEM default on every generation — v5e 16 MiB, v6e/v7x 32 MiB).
    """
    B = x.shape[0]
    tb, b_pad = _select_batch_tiling(B, max_batch_tile, min_grid_steps)

    # Append ones column (folds fc1 bias), zero-pad lanes to in_pad and rows to b_pad.
    x_aug = jnp.concatenate(
        [x.astype(jnp.float32), jnp.ones((B, 1), jnp.float32)], axis=1)
    x_aug = jnp.pad(x_aug, ((0, b_pad - B), (0, in_pad - (state_dim + 1))))

    # VMEM footprint estimate: x + out double-buffered, slab resident, ~4 tile-sized
    # f32 temporaries (h / hc / logits / softmax). Only raise the scoped-VMEM limit
    # when the chosen tile would exceed v5e's conservative 16 MiB default.
    est_bytes = 4 * (2 * tb * in_pad + slab.shape[0] * OUT_LANES
                     + 2 * tb * OUT_LANES + 4 * tb * OUT_LANES)
    vmem_limit = None
    if est_bytes > 12 * 1024 * 1024:
        vmem_limit = min(2 * est_bytes, 96 * 1024 * 1024)

    kernel = partial(_actor_critic_kernel, in_pad=in_pad, action_dim=action_dim,
                     use_bf16_matmul=use_bf16_matmul)
    out = pl.pallas_call(
        kernel,
        out_shape=jax.ShapeDtypeStruct((b_pad, OUT_LANES), out_dtype),
        grid=(b_pad // tb,),
        in_specs=[
            pl.BlockSpec((tb, in_pad), lambda i: (i, 0)),
            # Slab block index never changes -> pipeline keeps it resident, no
            # per-step re-DMA.  (Single-buffering it would only save ~143 KB.)
            pl.BlockSpec(slab.shape, lambda i: (0, 0)),
        ],
        out_specs=pl.BlockSpec((tb, OUT_LANES), lambda i: (i, 0)),
        compiler_params=pltpu.CompilerParams(
            dimension_semantics=("parallel",),        # shards across v7x's 2 TCs
            vmem_limit_bytes=vmem_limit),
    )(x_aug, slab)

    if return_fused:
        # Lane-dense result: lanes 0:action_dim = probs, lane action_dim = value.
        # Avoids a second full-array HBM pass when downstream consumes lanes directly.
        return out[:B]
    probs = out[:B, :action_dim]
    value = out[:B, action_dim:action_dim + 1]
    return probs, value


def init_linear(key, fan_in, fan_out):
    """PyTorch nn.Linear default init: U(-1/sqrt(fan_in), 1/sqrt(fan_in))."""
    kw, kb = jax.random.split(key)
    bound = 1.0 / math.sqrt(fan_in)
    # Weights stored as (in, out) — transpose of torch's (out, in).
    w = jax.random.uniform(kw, (fan_in, fan_out), jnp.float32, -bound, bound)
    b = jax.random.uniform(kb, (1, fan_out), jnp.float32, -bound, bound)
    return w, b


def make_params(key, state_dim, action_dim):
    keys = jax.random.split(key, 5)
    w1, b1 = init_linear(keys[0], state_dim, HIDDEN)
    wa, ba = init_linear(keys[1], HIDDEN, HEAD)
    wao, bao = init_linear(keys[2], HEAD, action_dim)
    wc, bc = init_linear(keys[3], HIDDEN, HEAD)
    wco, bco = init_linear(keys[4], HEAD, 1)
    return dict(w1=w1, b1=b1, wa=wa, ba=ba, wao=wao, bao=bao,
                wc=wc, bc=bc, wco=wco, bco=bco)


def reference_forward(x, p):
    h = jax.nn.relu(x @ p["w1"] + p["b1"])
    a = jax.nn.relu(h @ p["wa"] + p["ba"])
    probs = jax.nn.softmax(a @ p["wao"] + p["bao"], axis=-1)
    c = jax.nn.relu(h @ p["wc"] + p["bc"])
    value = c @ p["wco"] + p["bco"]
    return probs, value


if __name__ == "__main__":
    # Pendulum-style controller: state_dim=3 (cos θ, sin θ, θ̇), discretized action_dim=5.
    STATE_DIM, ACTION_DIM = 3, 5

    key = jax.random.PRNGKey(0)
    k_params, k_x1, k_x2 = jax.random.split(key, 3)
    params = make_params(k_params, STATE_DIM, ACTION_DIM)
    slab, in_pad = pack_params(params, STATE_DIM, ACTION_DIM)

    # --- 1) small batch (single grid step), exact f32 path -------------------
    B1 = 8
    x1 = jax.random.normal(k_x1, (B1, STATE_DIM), jnp.float32)
    probs1, value1 = jax.block_until_ready(
        actor_critic_forward(x1, slab, state_dim=STATE_DIM,
                             action_dim=ACTION_DIM, in_pad=in_pad))
    ref_p1, ref_v1 = reference_forward(x1, params)
    assert probs1.shape == (B1, ACTION_DIM) and value1.shape == (B1, 1)
    assert jnp.allclose(probs1, ref_p1, atol=1e-5, rtol=1e-5)
    assert jnp.allclose(value1, ref_v1, atol=1e-5, rtol=1e-5)
    assert jnp.allclose(jnp.sum(probs1, axis=-1), 1.0, atol=1e-5)

    # --- 2) bigger batch exercising the multi-step "parallel" grid + adaptive
    #        padding (B=300, tile cap 128 -> 3 steps of tb=104, only 12 pad rows)
    B2 = 300
    x2 = jax.random.normal(k_x2, (B2, STATE_DIM), jnp.float32)
    probs2, value2 = jax.block_until_ready(
        actor_critic_forward(x2, slab, state_dim=STATE_DIM,
                             action_dim=ACTION_DIM, in_pad=in_pad,
                             max_batch_tile=128, min_grid_steps=2))
    ref_p2, ref_v2 = reference_forward(x2, params)
    assert probs2.shape == (B2, ACTION_DIM) and value2.shape == (B2, 1)
    assert jnp.allclose(probs2, ref_p2, atol=1e-5, rtol=1e-5)
    assert jnp.allclose(value2, ref_v2, atol=1e-5, rtol=1e-5)

    # Fused (lane-dense) output path: no wrapper re-slice / second HBM pass.
    fused = jax.block_until_ready(
        actor_critic_forward(x1, slab, state_dim=STATE_DIM,
                             action_dim=ACTION_DIM, in_pad=in_pad,
                             return_fused=True))
    assert fused.shape == (B1, OUT_LANES)
    assert jnp.allclose(fused[:, :ACTION_DIM], probs1, atol=1e-6)
    assert jnp.allclose(fused[:, ACTION_DIM:ACTION_DIM + 1], value1, atol=1e-6)

    # --- 3) optional bf16-MXU path (v6e/v7x fast path), looser tolerance -----
    probs3, value3 = jax.block_until_ready(
        actor_critic_forward(x1, slab, state_dim=STATE_DIM,
                             action_dim=ACTION_DIM, in_pad=in_pad,
                             use_bf16_matmul=True))
    assert jnp.allclose(probs3, ref_p1, atol=5e-2, rtol=5e-2)
    assert jnp.allclose(value3, ref_v1, atol=5e-2, rtol=5e-2)
    assert jnp.allclose(jnp.sum(probs3, axis=-1), 1.0, atol=1e-3)

    print("KERNEL_OK")
</pallas_src>

<mosaic_0001>
module attributes {stable_mosaic.version = 11 : i64} {
  func.func @_actor_critic_kernel(%arg0: i32, %arg1: memref<8x8xf32, #tpu.memory_space<vmem>>, %arg2: memref<280x128xf32, #tpu.memory_space<vmem>>, %arg3: memref<8x128xf32, #tpu.memory_space<vmem>>) attributes {dimension_semantics = [#tpu.dimension_semantics<parallel>], iteration_bounds = array<i64: 1>, scalar_prefetch = 0 : i64, scratch_operands = 0 : i64, tpu.core_type = #tpu.core_type<tc>, window_params = [{transform_indices = @transform_0, window_bounds = array<i64: 8, 8>}, {pipeline_mode = #tpu.pipeline_mode<synchronous>, transform_indices = @transform_1, window_bounds = array<i64: 280, 128>}, {transform_indices = @transform_2, window_bounds = array<i64: 8, 128>}]} {
    %c0 = arith.constant 0 : index
    %c0_0 = arith.constant 0 : index
    %0 = vector.load %arg1[%c0, %c0_0] : memref<8x8xf32, #tpu.memory_space<vmem>>, vector<8x8xf32>
    %c0_1 = arith.constant 0 : index
    %c0_2 = arith.constant 0 : index
    %1 = vector.load %arg2[%c0_1, %c0_2] : memref<280x128xf32, #tpu.memory_space<vmem>>, vector<8x128xf32>
    %c8 = arith.constant 8 : index
    %c0_3 = arith.constant 0 : index
    %2 = vector.load %arg2[%c8, %c0_3] : memref<280x128xf32, #tpu.memory_space<vmem>>, vector<128x128xf32>
    %c136 = arith.constant 136 : index
    %c0_4 = arith.constant 0 : index
    %3 = vector.load %arg2[%c136, %c0_4] : memref<280x128xf32, #tpu.memory_space<vmem>>, vector<1x128xf32>
    %c144 = arith.constant 144 : index
    %c0_5 = arith.constant 0 : index
    %4 = vector.load %arg2[%c144, %c0_5] : memref<280x128xf32, #tpu.memory_space<vmem>>, vector<128x128xf32>
    %c272 = arith.constant 272 : index
    %c0_6 = arith.constant 0 : index
    %5 = vector.load %arg2[%c272, %c0_6] : memref<280x128xf32, #tpu.memory_space<vmem>>, vector<1x128xf32>
    %cst = arith.constant dense<0.000000e+00> : vector<8x128xf32>
    %6 = tpu.matmul %0, %1, %cst {dimension_numbers = #tpu.dot_dimension_numbers<[1], [0], [0], [1], [0, 0, 1, 1], [], []>} : vector<8x8xf32>, vector<8x128xf32>, vector<8x128xf32> -> vector<8x128xf32>
    %cst_7 = arith.constant 0.000000e+00 : f32
    %7 = vector.broadcast %cst_7 : f32 to vector<8x128xf32>
    %8 = arith.maximumf %6, %7 : vector<8x128xf32>
    %cst_8 = arith.constant dense<0.000000e+00> : vector<8x128xf32>
    %9 = tpu.matmul %8, %2, %cst_8 {dimension_numbers = #tpu.dot_dimension_numbers<[1], [0], [0], [1], [0, 0, 1, 1], [], []>} : vector<8x128xf32>, vector<128x128xf32>, vector<8x128xf32> -> vector<8x128xf32>
    %10 = vector.broadcast %3 : vector<1x128xf32> to vector<8x128xf32>
    %11 = arith.addf %9, %10 : vector<8x128xf32>
    %cst_9 = arith.constant 0.000000e+00 : f32
    %12 = vector.broadcast %cst_9 : f32 to vector<8x128xf32>
    %13 = arith.maximumf %11, %12 : vector<8x128xf32>
    %cst_10 = arith.constant dense<0.000000e+00> : vector<8x128xf32>
    %14 = tpu.matmul %13, %4, %cst_10 {dimension_numbers = #tpu.dot_dimension_numbers<[1], [0], [0], [1], [0, 0, 1, 1], [], []>} : vector<8x128xf32>, vector<128x128xf32>, vector<8x128xf32> -> vector<8x128xf32>
    %15 = vector.broadcast %5 : vector<1x128xf32> to vector<8x128xf32>
    %16 = arith.addf %14, %15 : vector<8x128xf32>
    %17 = tpu.iota {dimensions = array<i32: 1>} : vector<1x128xi32>
    %c5_i32 = arith.constant 5 : i32
    %18 = vector.broadcast %c5_i32 : i32 to vector<1x128xi32>
    %19 = arith.cmpi slt, %17, %18 : vector<1x128xi32>
    %cst_11 = arith.constant 0xFF800000 : f32
    %20 = vector.shape_cast %19 : vector<1x128xi1> to vector<1x128xi1>
    %21 = vector.broadcast %20 : vector<1x128xi1> to vector<8x128xi1>
    %22 = vector.broadcast %cst_11 : f32 to vector<8x128xf32>
    %23 = arith.select %21, %16, %22 : vector<8x128xi1>, vector<8x128xf32>
    %cst_12 = arith.constant dense<0xFF800000> : vector<8xf32>
    %24 = vector.multi_reduction <maximumf>, %23, %cst_12 [1] : vector<8x128xf32> to vector<8xf32>
    %25 = vector.shape_cast %24 : vector<8xf32> to vector<8x1xf32>
    %26 = vector.broadcast %25 : vector<8x1xf32> to vector<8x128xf32>
    %27 = arith.subf %23, %26 : vector<8x128xf32>
    %28 = math.exp %27 : vector<8x128xf32>
    %cst_13 = arith.constant dense<0.000000e+00> : vector<8xf32>
    %29 = vector.multi_reduction <add>, %28, %cst_13 [1] : vector<8x128xf32> to vector<8xf32>
    %30 = vector.shape_cast %29 : vector<8xf32> to vector<8x1xf32>
    %31 = tpu.reciprocal %30 : vector<8x1xf32> -> vector<8x1xf32>
    %32 = vector.broadcast %31 : vector<8x1xf32> to vector<8x128xf32>
    %33 = arith.mulf %28, %32 : vector<8x128xf32>
    %34 = vector.shape_cast %19 : vector<1x128xi1> to vector<1x128xi1>
    %35 = vector.broadcast %34 : vector<1x128xi1> to vector<8x128xi1>
    %36 = arith.select %35, %33, %16 : vector<8x128xi1>, vector<8x128xf32>
    %c0_14 = arith.constant 0 : index
    %c0_15 = arith.constant 0 : index
    %37 = vector.load %arg3[%c0_14, %c0_15] : memref<8x128xf32, #tpu.memory_space<vmem>>, vector<8x128xf32>
    tpu.vector_store %arg3[%c0_14, %c0_15], %36 {strides = array<i32>} : memref<8x128xf32, #tpu.memory_space<vmem>>, vector<8x128xf32>,
    return
  }
  func.func @transform_0(%arg0: i32) -> (i32, i32) {
    %c0_i32 = arith.constant 0 : i32
    %c0_i32_0 = arith.constant 0 : i32
    return %arg0, %c0_i32 : i32, i32
  }
  func.func @transform_1(%arg0: i32) -> (i32, i32) {
    %c0_i32 = arith.constant 0 : i32
    %c0_i32_0 = arith.constant 0 : i32
    %c0_i32_1 = arith.constant 0 : i32
    return %c0_i32, %c0_i32_0 : i32, i32
  }
  func.func @transform_2(%arg0: i32) -> (i32, i32) {
    %c0_i32 = arith.constant 0 : i32
    %c0_i32_0 = arith.constant 0 : i32
    return %arg0, %c0_i32 : i32, i32
  }
}

</mosaic_0001>

<llo_original>
// kernel: tpu_custom_call.1
$region0: #{tpu_custom_call.1}
  #allocation0 [shape = 'u32[]', space=smem, size = 0x4, offset = 0x4, fixed_abs, tag = 'smem constant byte address 0x4 - core index']
  #allocation1 [shape = 'u32[144,128]{1,0:T(1,128)}', space=vmem, size = 0x12000, scoped, tag = 'internal scratch']
  %s0 = inlined_call_operand.hbm [shape: f32[8,8], index: 0, kind: input, shape index: {}]
  %s1 = inlined_call_operand.hbm [shape: f32[280,128], index: 1, kind: input, shape index: {}]
  %s2 = inlined_call_operand.hbm [shape: f32[8,128], index: 2, kind: output, shape index: {}]
  %s3 = sld [smem:[#allocation0]]
  $region26: #{tpu_custom_call.1} parent=0
    _
  %s5 = ssub.s32 1, %s3
  %s6 = scalar_select 0, %s5, %s3
  $region1: #{tpu_custom_call.1} parent=0
    #allocation2 [shape = 'u8[4096]{0}', space=vmem, size = 0x1000, scoped, tag = 'input window, operand 0, single buffered']
    #allocation3 [shape = 's32[1]{0}', space=sflag, size = 0x4, scoped, tag = 'scoped memory for tpu_custom_call.1']
    #allocation4 [shape = 's32[1]{0}', space=sflag, size = 0x4, scoped, tag = 'scoped memory for tpu_custom_call.1']
    #allocation5 [shape = 'u8[143360]{0}', space=vmem, size = 0x23000, scoped, tag = 'input window, operand 1, single buffered']
    #allocation6 [shape = 's32[1]{0}', space=sflag, size = 0x4, scoped, tag = 'scoped memory for tpu_custom_call.1']
    #allocation7 [shape = 'u8[4096]{0}', space=vmem, size = 0x1000, scoped, tag = 'output window, operand 0, single buffered']
    %7 = vsyncpa [#allocation3], 0
    %8 = vsyncpa [#allocation6], 0
    %9 = vsyncpa [#allocation4], 0
    // Predicated region
    $region2: #{tpu_custom_call.1} parent=1 // pred_check
      _
    $region3: #{tpu_custom_call.1} parent=1 // pred_check_branch
      %11 = sbr.rel (0) target = $region5
    $region4: #{tpu_custom_call.1} parent=1 // pred_region
      %s13 = ssub.s32 128, 128
      %14 = vsyncadd [#allocation3], %s13
      %s16 = sshll.u32 [#allocation2], 4
      %s17 = int_to_ptr.vmem [resolvable:$true] %s16
      %19 = dma.hbm_to_vmem [thread:$0]  %s0, 128, %s17, [#allocation3]
    $region5: #{tpu_custom_call.1} parent=1 // pred_fallthru
      _
    // Predicated region
    $region6: #{tpu_custom_call.1} parent=1 // pred_check
      _
    $region7: #{tpu_custom_call.1} parent=1 // pred_check_branch
      %21 = sbr.rel (0) target = $region9
    $region8: #{tpu_custom_call.1} parent=1 // pred_region
      %s23 = ssub.s32 4480, 4480
      %24 = vsyncadd [#allocation6], %s23
      %s25 = sshll.u32 [#allocation5], 4
      %s26 = int_to_ptr.vmem [resolvable:$true] %s25
      %31 = dma.hbm_to_vmem [thread:$0]  %s1, 4480, %s26, [#allocation6], 128, 128, 8
    $region9: #{tpu_custom_call.1} parent=1 // pred_fallthru
      _
    // Predicated region
    $region10: #{tpu_custom_call.1} parent=1 // pred_check
      _
    $region11: #{tpu_custom_call.1} parent=1 // pred_check_branch
      %33 = sbr.rel (0) target = $region13
    $region12: #{tpu_custom_call.1} parent=1 // pred_region
      %34 = dma.done [#allocation3], 128
    $region13: #{tpu_custom_call.1} parent=1 // pred_fallthru
      _
    // Predicated region
    $region14: #{tpu_custom_call.1} parent=1 // pred_check
      _
    $region15: #{tpu_custom_call.1} parent=1 // pred_check_branch
      %36 = sbr.rel (0) target = $region17
    $region16: #{tpu_custom_call.1} parent=1 // pred_region
      %37 = dma.done [#allocation6], 4480
    $region17: #{tpu_custom_call.1} parent=1 // pred_fallthru
      _
    %v38 = vld [vmem:[#allocation2] sm:$0xff]
    %v39 = vld [vmem:[#allocation5] sm:$0xff]
    %v40 = vld [vmem:[#allocation5 + $0x8] sm:$0xff]
    %v41 = vld [vmem:[#allocation5 + $0x10] sm:$0xff]
    %v42 = vld [vmem:[#allocation5 + $0x18] sm:$0xff]
    %v43 = vld [vmem:[#allocation5 + $0x20] sm:$0xff]
    %v44 = vld [vmem:[#allocation5 + $0x28] sm:$0xff]
    %v45 = vld [vmem:[#allocation5 + $0x30] sm:$0xff]
    %v46 = vld [vmem:[#allocation5 + $0x38] sm:$0xff]
    %v47 = vld [vmem:[#allocation5 + $0x40] sm:$0xff]
    %v48 = vld [vmem:[#allocation5 + $0x48] sm:$0xff]
    %v49 = vld [vmem:[#allocation5 + $0x50] sm:$0xff]
    %v50 = vld [vmem:[#allocation5 + $0x58] sm:$0xff]
    %v51 = vld [vmem:[#allocation5 + $0x60] sm:$0xff]
    %v52 = vld [vmem:[#allocation5 + $0x68] sm:$0xff]
    %v53 = vld [vmem:[#allocation5 + $0x70] sm:$0xff]
    %v54 = vld [vmem:[#allocation5 + $0x78] sm:$0xff]
    %v55 = vld [vmem:[#allocation5 + $0x80] sm:$0xff]
    %v56 = vld [vmem:[#allocation5 + $0x88] sm:$0x1]
    %v57 = vld [vmem:[#allocation5 + $0x90] sm:$0xff]
    %v58 = vld [vmem:[#allocation5 + $0x98] sm:$0xff]
    %v59 = vld [vmem:[#allocation5 + $0xa0] sm:$0xff]
    %v60 = vld [vmem:[#allocation5 + $0xa8] sm:$0xff]
    %v61 = vld [vmem:[#allocation5 + $0xb0] sm:$0xff]
    %v62 = vld [vmem:[#allocation5 + $0xb8] sm:$0xff]
    %v63 = vld [vmem:[#allocation5 + $0xc0] sm:$0xff]
    %v64 = vld [vmem:[#allocation5 + $0xc8] sm:$0xff]
    %v65 = vld [vmem:[#allocation5 + $0xd0] sm:$0xff]
    %v66 = vld [vmem:[#allocation5 + $0xd8] sm:$0xff]
    %v67 = vld [vmem:[#allocation5 + $0xe0] sm:$0xff]
    %v68 = vld [vmem:[#allocation5 + $0xe8] sm:$0xff]
    %v69 = vld [vmem:[#allocation5 + $0xf0] sm:$0xff]
    %v70 = vld [vmem:[#allocation5 + $0xf8] sm:$0xff]
    %v71 = vld [vmem:[#allocation5 + $0x100] sm:$0xff]
    %v72 = vld [vmem:[#allocation5 + $0x108] sm:$0xff]
    %v73 = vld [vmem:[#allocation5 + $0x110] sm:$0x1]
    %vm74 = vcmask 64512
    %v76 = vsel %vm74, %v38, 0
    %78 = vmatprep.subr.mxu0 0.0
    %79 = vmatpush1.msra.mxu0 0.0
    %80 = vmatprep.subr.mxu0 0.0
    %81 = vmatpush1.msra.mxu0 0.0
    %82 = vmatprep.subr.mxu0 0.0
    %83 = vmatpush1.msra.mxu0 0.0
    %84 = vmatprep.subr.mxu0 0.0
    %85 = vmatpush1.msra.mxu0 0.0
    %86 = vmatprep.subr.mxu0 0.0
    %87 = vmatpush1.msra.mxu0 0.0
    %88 = vmatprep.subr.mxu0 0.0
    %89 = vmatpush1.msra.mxu0 0.0
    %90 = vmatprep.subr.mxu0 0.0
    %91 = vmatpush1.msra.mxu0 0.0
    %92 = vmatprep.subr.mxu0 0.0
    %93 = vmatpush1.msra.mxu0 0.0
    %94 = vmatprep.subr.mxu0 0.0
    %95 = vmatpush1.msra.mxu0 0.0
    %96 = vmatprep.subr.mxu0 0.0
    %97 = vmatpush1.msra.mxu0 0.0
    %98 = vmatprep.subr.mxu0 0.0
    %99 = vmatpush1.msra.mxu0 0.0
    %100 = vmatprep.subr.mxu0 0.0
    %101 = vmatpush1.msra.mxu0 0.0
    %102 = vmatprep.subr.mxu0 0.0
    %103 = vmatpush1.msra.mxu0 0.0
    %104 = vmatprep.subr.mxu0 0.0
    %105 = vmatpush1.msra.mxu0 0.0
    %106 = vmatprep.subr.mxu0 0.0
    %107 = vmatpush1.msra.mxu0 0.0
    %108 = vmatprep.subr.mxu0 0.0
    %109 = vmatpush1.msra.mxu0 %v39
    %110 = vmatprep.subr.mxu0 0.0
    %111 = vmatpush2.msra.mxu0 0.0
    %112 = vmatprep.subr.mxu0 0.0
    %113 = vmatpush2.msra.mxu0 0.0
    %114 = vmatprep.subr.mxu0 0.0
    %115 = vmatpush2.msra.mxu0 0.0
    %116 = vmatprep.subr.mxu0 0.0
    %117 = vmatpush2.msra.mxu0 0.0
    %118 = vmatprep.subr.mxu0 0.0
    %119 = vmatpush2.msra.mxu0 0.0
    %120 = vmatprep.subr.mxu0 0.0
    %121 = vmatpush2.msra.mxu0 0.0
    %122 = vmatprep.subr.mxu0 0.0
    %123 = vmatpush2.msra.mxu0 0.0
    %124 = vmatprep.subr.mxu0 0.0
    %125 = vmatpush2.msra.mxu0 0.0
    %126 = vmatprep.subr.mxu0 0.0
    %127 = vmatpush2.msra.mxu0 0.0
    %128 = vmatprep.subr.mxu0 0.0
    %129 = vmatpush2.msra.mxu0 0.0
    %130 = vmatprep.subr.mxu0 0.0
    %131 = vmatpush2.msra.mxu0 0.0
    %132 = vmatprep.subr.mxu0 0.0
    %133 = vmatpush2.msra.mxu0 0.0
    %134 = vmatprep.subr.mxu0 0.0
    %135 = vmatpush2.msra.mxu0 0.0
    %136 = vmatprep.subr.mxu0 0.0
    %137 = vmatpush2.msra.mxu0 0.0
    %138 = vmatprep.subr.mxu0 0.0
    %139 = vmatpush2.msra.mxu0 0.0
    %140 = vmatprep.subr.mxu0 0.0
    %141 = vmatpush2.msra.mxu0 0.0
    %142 = vmatprep.mubr.f32.mxu0 0.0
    %143 = vmatmul.mubr.f32.gmra.mxu0 %v76
    %v144 = vpop.f32.mrf.mxu0
    %v145 = vadd.f32 0.0, %v144
    %v146 = vpop.f32.mrf.mxu0
    %147 = vdwg.mxu0
    %v148 = vmax.f32 %v145, 0.0
    %v149 = vlaneseq
    %v150 = vshrl.u32 %v149, 7
    %v151 = vsub.s32 0, %v150
    %v152 = vrot.slane %v56, %v151
    %153 = vmatprep.subr.mxu0 0.0
    %154 = vmatpush1.msra.mxu0 %v55
    %155 = vmatprep.subr.mxu0 0.0
    %156 = vmatpush1.msra.mxu0 %v54
    %157 = vmatprep.subr.mxu0 0.0
    %158 = vmatpush1.msra.mxu0 %v53
    %159 = vmatprep.subr.mxu0 0.0
    %160 = vmatpush1.msra.mxu0 %v52
    %161 = vmatprep.subr.mxu0 0.0
    %162 = vmatpush1.msra.mxu0 %v51
    %163 = vmatprep.subr.mxu0 0.0
    %164 = vmatpush1.msra.mxu0 %v50
    %165 = vmatprep.subr.mxu0 0.0
    %166 = vmatpush1.msra.mxu0 %v49
    %167 = vmatprep.subr.mxu0 0.0
    %168 = vmatpush1.msra.mxu0 %v48
    %169 = vmatprep.subr.mxu0 0.0
    %170 = vmatpush1.msra.mxu0 %v47
    %171 = vmatprep.subr.mxu0 0.0
    %172 = vmatpush1.msra.mxu0 %v46
    %173 = vmatprep.subr.mxu0 0.0
    %174 = vmatpush1.msra.mxu0 %v45
    %175 = vmatprep.subr.mxu0 0.0
    %176 = vmatpush1.msra.mxu0 %v44
    %177 = vmatprep.subr.mxu0 0.0
    %178 = vmatpush1.msra.mxu0 %v43
    %179 = vmatprep.subr.mxu0 0.0
    %180 = vmatpush1.msra.mxu0 %v42
    %181 = vmatprep.subr.mxu0 0.0
    %182 = vmatpush1.msra.mxu0 %v41
    %183 = vmatprep.subr.mxu0 0.0
    %184 = vmatpush1.msra.mxu0 %v40
    %185 = vmatprep.subr.mxu0 0.0
    %186 = vmatpush2.msra.mxu0 0.0
    %187 = vmatprep.subr.mxu0 0.0
    %188 = vmatpush2.msra.mxu0 0.0
    %189 = vmatprep.subr.mxu0 0.0
    %190 = vmatpush2.msra.mxu0 0.0
    %191 = vmatprep.subr.mxu0 0.0
    %192 = vmatpush2.msra.mxu0 0.0
    %193 = vmatprep.subr.mxu0 0.0
    %194 = vmatpush2.msra.mxu0 0.0
    %195 = vmatprep.subr.mxu0 0.0
    %196 = vmatpush2.msra.mxu0 0.0
    %197 = vmatprep.subr.mxu0 0.0
    %198 = vmatpush2.msra.mxu0 0.0
    %199 = vmatprep.subr.mxu0 0.0
    %200 = vmatpush2.msra.mxu0 0.0
    %201 = vmatprep.subr.mxu0 0.0
    %202 = vmatpush2.msra.mxu0 0.0
    %203 = vmatprep.subr.mxu0 0.0
    %204 = vmatpush2.msra.mxu0 0.0
    %205 = vmatprep.subr.mxu0 0.0
    %206 = vmatpush2.msra.mxu0 0.0
    %207 = vmatprep.subr.mxu0 0.0
    %208 = vmatpush2.msra.mxu0 0.0
    %209 = vmatprep.subr.mxu0 0.0
    %210 = vmatpush2.msra.mxu0 0.0
    %211 = vmatprep.subr.mxu0 0.0
    %212 = vmatpush2.msra.mxu0 0.0
    %213 = vmatprep.subr.mxu0 0.0
    %214 = vmatpush2.msra.mxu0 0.0
    %215 = vmatprep.subr.mxu0 0.0
    %216 = vmatpush2.msra.mxu0 0.0
    %217 = vmatprep.mubr.f32.mxu0 0.0
    %218 = vmatmul.mubr.f32.gmra.mxu0 %v148
    %v219 = vpop.f32.mrf.mxu0
    %v220 = vadd.f32 %v152, %v219
    %v221 = vpop.f32.mrf.mxu0
    %222 = vdwg.mxu0
    %v223 = vmax.f32 %v220, 0.0
    %v224 = vlaneseq
    %v225 = vshrl.u32 %v224, 7
    %v226 = vsub.s32 0, %v225
    %v227 = vrot.slane %v73, %v226
    %228 = vmatprep.subr.mxu0 0.0
    %229 = vmatpush1.msra.mxu0 %v72
    %230 = vmatprep.subr.mxu0 0.0
    %231 = vmatpush1.msra.mxu0 %v71
    %232 = vmatprep.subr.mxu0 0.0
    %233 = vmatpush1.msra.mxu0 %v70
    %234 = vmatprep.subr.mxu0 0.0
    %235 = vmatpush1.msra.mxu0 %v69
    %236 = vmatprep.subr.mxu0 0.0
    %237 = vmatpush1.msra.mxu0 %v68
    %238 = vmatprep.subr.mxu0 0.0
    %239 = vmatpush1.msra.mxu0 %v67
    %240 = vmatprep.subr.mxu0 0.0
    %241 = vmatpush1.msra.mxu0 %v66
    %242 = vmatprep.subr.mxu0 0.0
    %243 = vmatpush1.msra.mxu0 %v65
    %244 = vmatprep.subr.mxu0 0.0
    %245 = vmatpush1.msra.mxu0 %v64
    %246 = vmatprep.subr.mxu0 0.0
    %247 = vmatpush1.msra.mxu0 %v63
    %248 = vmatprep.subr.mxu0 0.0
    %249 = vmatpush1.msra.mxu0 %v62
    %250 = vmatprep.subr.mxu0 0.0
    %251 = vmatpush1.msra.mxu0 %v61
    %252 = vmatprep.subr.mxu0 0.0
    %253 = vmatpush1.msra.mxu0 %v60
    %254 = vmatprep.subr.mxu0 0.0
    %255 = vmatpush1.msra.mxu0 %v59
    %256 = vmatprep.subr.mxu0 0.0
    %257 = vmatpush1.msra.mxu0 %v58
    %258 = vmatprep.subr.mxu0 0.0
    %259 = vmatpush1.msra.mxu0 %v57
    %260 = vmatprep.subr.mxu0 0.0
    %261 = vmatpush2.msra.mxu0 0.0
    %262 = vmatprep.subr.mxu0 0.0
    %263 = vmatpush2.msra.mxu0 0.0
    %264 = vmatprep.subr.mxu0 0.0
    %265 = vmatpush2.msra.mxu0 0.0
    %266 = vmatprep.subr.mxu0 0.0
    %267 = vmatpush2.msra.mxu0 0.0
    %268 = vmatprep.subr.mxu0 0.0
    %269 = vmatpush2.msra.mxu0 0.0
    %270 = vmatprep.subr.mxu0 0.0
    %271 = vmatpush2.msra.mxu0 0.0
    %272 = vmatprep.subr.mxu0 0.0
    %273 = vmatpush2.msra.mxu0 0.0
    %274 = vmatprep.subr.mxu0 0.0
    %275 = vmatpush2.msra.mxu0 0.0
    %276 = vmatprep.subr.mxu0 0.0
    %277 = vmatpush2.msra.mxu0 0.0
    %278 = vmatprep.subr.mxu0 0.0
    %279 = vmatpush2.msra.mxu0 0.0
    %280 = vmatprep.subr.mxu0 0.0
    %281 = vmatpush2.msra.mxu0 0.0
    %282 = vmatprep.subr.mxu0 0.0
    %283 = vmatpush2.msra.mxu0 0.0
    %284 = vmatprep.subr.mxu0 0.0
    %285 = vmatpush2.msra.mxu0 0.0
    %286 = vmatprep.subr.mxu0 0.0
    %287 = vmatpush2.msra.mxu0 0.0
    %288 = vmatprep.subr.mxu0 0.0
    %289 = vmatpush2.msra.mxu0 0.0
    %290 = vmatprep.subr.mxu0 0.0
    %291 = vmatpush2.msra.mxu0 0.0
    %292 = vmatprep.mubr.f32.mxu0 0.0
    %293 = vmatmul.mubr.f32.gmra.mxu0 %v223
    %v294 = vpop.f32.mrf.mxu0
    %v295 = vadd.f32 %v227, %v294
    %v296 = vpop.f32.mrf.mxu0
    %297 = vdwg.mxu0
    %v298 = vlaneseq
    %v299 = vand.u32 %v298, 127
    %vm300 = vcmp.lt.s32.totalorder %v299, 5
    %v301 = vsel %vm300, 1, 0
    %vm302 = vcmp.eq.s32.totalorder %v301, 1
    %v303 = vsel %vm302, %v295, -inf
    %304 = vmax.xlane.f32.xlu0 %v303
    %v305 = vpop.xlane.xlu0 %304
    %v306 = vsub.f32 %v303, %v305
    %v307 = vmul.f32 %v306, 1.442695
    %v308 = vpow.pop %v307
    %309 = vadd.xlane.f32.xlu0 %v308
    %v310 = vpop.xlane.xlu0 %309
    %v311 = vrcp.pop %v310
    %v312 = vmul.f32 %v308, %v311
    %v313 = vsel %vm302, %v312, %v295
    %314 = vst [vmem:[#allocation7] sm:$0xff] %v313
    // Predicated region
    $region18: #{tpu_custom_call.1} parent=1 // pred_check
      _
    $region19: #{tpu_custom_call.1} parent=1 // pred_check_branch
      %316 = sbr.rel (0) target = $region21
    $region20: #{tpu_custom_call.1} parent=1 // pred_region
      %s318 = ssub.s32 128, 128
      %319 = vsyncadd [#allocation4], %s318
      %s321 = sshll.u32 [#allocation7], 4
      %s322 = int_to_ptr.vmem [resolvable:$true] %s321
      %324 = dma.vmem_to_hbm [thread:$0]  %s322, 128, %s2, [#allocation4]
    $region21: #{tpu_custom_call.1} parent=1 // pred_fallthru
      _
    // Predicated region
    $region22: #{tpu_custom_call.1} parent=1 // pred_check
      _
    $region23: #{tpu_custom_call.1} parent=1 // pred_check_branch
      %326 = sbr.rel (0) target = $region25
    $region24: #{tpu_custom_call.1} parent=1 // pred_region
      %327 = dma.done [#allocation4], 128
    $region25: #{tpu_custom_call.1} parent=1 // pred_fallthru
      _
    %328 = vsyncpa [#allocation3], 1
    %329 = vsyncpa [#allocation6], 1
    %330 = vsyncpa [#allocation4], 1

</llo_original>
